<compile_context>
chip_gen: v5e
topology: v5e:2x2
jax: 0.10.0
libtpu: 0.0.40
codegen_flags: <defaults>
</compile_context>

<pallas_src>
import math

import jax
import jax.numpy as jnp
from jax.experimental import pallas as pl
from jax.experimental.pallas import tpu as pltpu


def _round_up(x, m):
    return (x + m - 1) // m * m


def _vmem_capacity_bytes():
    try:
        return int(pltpu.get_tpu_info().vmem_capacity_bytes)
    except Exception:
        return 64 << 20  # conservative fallback (v7x per-TC VMEM)


def _cloak_kernel(scale_ref, x_ref, locs_ref, rhos_ref, eps_ref, o_ref, noise_ref):
    # O(D) noise math runs once per d-tile (batch axis is the fastest grid
    # axis, executed sequentially per core), then is reused for every batch tile.
    @pl.when(pl.program_id(1) == 0)
    def _():
        min_s = scale_ref[0]
        max_s = scale_ref[1]
        scales = (1.0 + jnp.tanh(rhos_ref[...])) * 0.5 * (max_s - min_s) + min_s
        noise_ref[...] = locs_ref[...] + scales * eps_ref[...]

    # Steady state: pure HBM-streaming add; (1, TILE_D) row broadcasts over
    # the batch tile.  mask is None branch.
    # TODO(synk): on v6e/v7x the noise row could be held in bf16 when x is
    # bf16 to halve VALU/vreg pressure; kept f32 here for one code path on v5e.
    o_ref[...] = (x_ref[...] + noise_ref[...]).astype(o_ref.dtype)


def _cloak_kernel_masked(scale_ref, x_ref, locs_ref, rhos_ref, eps_ref, mask_ref,
                         o_ref, noise_ref):
    @pl.when(pl.program_id(1) == 0)
    def _():
        min_s = scale_ref[0]
        max_s = scale_ref[1]
        scales = (1.0 + jnp.tanh(rhos_ref[...])) * 0.5 * (max_s - min_s) + min_s
        noise_ref[...] = locs_ref[...] + scales * (eps_ref[...] * mask_ref[...])

    # mask branch: x * mask + noise  (mask block stays resident in VMEM across
    # batch tiles because its block index does not change).
    o_ref[...] = (x_ref[...] * mask_ref[...] + noise_ref[...]).astype(o_ref.dtype)


def _choose_tiles(N, D, itemsize, per_tile_budget, sub):
    """N, D are already padded: D % 128 == 0; N % sub == 0 unless N < sub."""
    d_blocks = D // 128
    # Keep >= 2 d-tiles whenever possible so the "parallel" d axis can feed
    # both TensorCores on v7x (neutral on single-TC v5e/v6e).
    max_blocks = d_blocks // 2 if d_blocks >= 2 else 1
    tb = min(16, max_blocks)                 # target up to 2048 lanes per tile
    while d_blocks % tb != 0:
        tb -= 1
    tile_d = tb * 128

    if N % sub != 0:
        return N, tile_d                     # tiny batch (< sub): full-extent sublane tile
    max_n = max(sub, (per_tile_budget // (tile_d * itemsize)) // sub * sub)
    tile_n = min(N, max_n)
    while N % tile_n != 0:
        tile_n -= sub
    return tile_n, tile_d


def cloak_noise_forward(x, locs, rhos, epsilon, min_scale, max_scale, mask=None):
    """x: (N, C, H, W); locs/rhos/epsilon/mask: (C, H, W). Returns (N, C, H, W)."""
    N = x.shape[0]
    D = math.prod(locs.shape)
    itemsize = x.dtype.itemsize
    sub = 16 if itemsize == 2 else 8

    # Pad instead of full-extent fallbacks: keeps tiles lane-dense and VMEM bounded.
    D_pad = _round_up(D, 128)
    N_pad = N if (N % sub == 0 or N < sub) else _round_up(N, sub)

    x2 = x.reshape(N, D)
    if D_pad != D or N_pad != N:
        x2 = jnp.pad(x2, ((0, N_pad - N), (0, D_pad - D)))

    def prep(p):
        row = p.reshape(1, D).astype(jnp.float32)
        if D_pad != D:
            row = jnp.pad(row, ((0, 0), (0, D_pad - D)))
        return row

    locs2, rhos2, eps2 = prep(locs), prep(rhos), prep(epsilon)
    scale_bounds = jnp.asarray([min_scale, max_scale], dtype=jnp.float32)

    # Generation-aware per-tile budget (~6.4 MiB on v7x, 8 MiB on v5e/v6e).
    vmem_cap = _vmem_capacity_bytes()
    per_tile_budget = min(8 << 20, vmem_cap // 10)
    tile_n, tile_d = _choose_tiles(N_pad, D_pad, itemsize, per_tile_budget, sub)

    # Batch-tile axis fastest so parameter blocks (index (0, d)) are DMA'd once
    # per d-tile and the noise scratch is valid for all batch tiles of that d.
    grid = (D_pad // tile_d, N_pad // tile_n)

    x_spec = pl.BlockSpec((tile_n, tile_d), lambda d, n: (n, d))
    p_spec = pl.BlockSpec((1, tile_d), lambda d, n: (0, d))
    smem_spec = pl.BlockSpec(memory_space=pltpu.MemorySpace.SMEM)

    if mask is None:
        kernel = _cloak_kernel
        in_specs = [smem_spec, x_spec, p_spec, p_spec, p_spec]
        args = (scale_bounds, x2, locs2, rhos2, eps2)
        n_param_rows = 3
    else:
        mask2 = prep(mask)
        kernel = _cloak_kernel_masked
        in_specs = [smem_spec, x_spec, p_spec, p_spec, p_spec, p_spec]
        args = (scale_bounds, x2, locs2, rhos2, eps2, mask2)
        n_param_rows = 4

    # Explicit scoped-VMEM sizing: x/out double-buffered tiles + param rows +
    # noise scratch + headroom, clamped to physical capacity.
    tile_bytes = tile_n * tile_d * itemsize
    vmem_limit = 4 * tile_bytes + (2 * n_param_rows + 1) * tile_d * 4 + (4 << 20)
    vmem_limit = int(min(max(vmem_limit, 16 << 20), vmem_cap))

    out = pl.pallas_call(
        kernel,
        out_shape=jax.ShapeDtypeStruct((N_pad, D_pad), x.dtype),
        grid=grid,
        in_specs=in_specs,
        out_specs=pl.BlockSpec((tile_n, tile_d), lambda d, n: (n, d)),
        scratch_shapes=[pltpu.VMEM((1, tile_d), jnp.float32)],
        compiler_params=pltpu.CompilerParams(
            dimension_semantics=("parallel", "arbitrary"),
            vmem_limit_bytes=vmem_limit),
    )(*args)

    if D_pad != D or N_pad != N:
        out = out[:N, :D]
    return out.reshape(x.shape)


def _reference(x, locs, rhos, epsilon, min_scale, max_scale, mask=None):
    scales = (1.0 + jnp.tanh(rhos)) / 2.0 * (max_scale - min_scale) + min_scale
    if mask is None:
        noise = locs + scales * epsilon
        return x + noise
    noise = locs + scales * (epsilon * mask)
    return x * mask + noise


if __name__ == "__main__":
    # Small shapes consistent with the module: input NCHW, params per-pixel.
    N, C, H, W = 2, 4, 16, 16
    min_scale, max_scale = 0.0, 1.0

    key = jax.random.PRNGKey(0)
    k_x, k_locs, k_eps, k_mask, k_xr = jax.random.split(key, 5)

    x = jax.random.normal(k_x, (N, C, H, W), dtype=jnp.float32)

    # Deterministic parameter init mirroring __init__:
    #   locs <- copy of given_locs, rhos <- ones - 3
    given_locs = jax.random.normal(k_locs, (C, H, W), dtype=jnp.float32) * 0.05
    locs = given_locs
    rhos = jnp.ones((C, H, W), dtype=jnp.float32) - 3.0

    # epsilon ~ Normal(0, 0.1), sampled deterministically outside the kernel.
    # TODO(synk): in-kernel sampling (pltpu.prng_seed / stateful_normal) cannot be
    # bit-identical to a host-side torch Normal sample, so epsilon is an input.
    epsilon = jax.random.normal(k_eps, (C, H, W), dtype=jnp.float32) * 0.1

    # mask-free path
    out = cloak_noise_forward(x, locs, rhos, epsilon, min_scale, max_scale)
    out = jax.block_until_ready(out)
    ref = _reference(x, locs, rhos, epsilon, min_scale, max_scale)
    assert out.shape == x.shape and out.dtype == x.dtype
    assert jnp.allclose(out, ref, atol=1e-5, rtol=1e-5)

    # masked path
    mask = (jax.random.uniform(k_mask, (C, H, W)) > 0.5).astype(jnp.float32)
    out_m = cloak_noise_forward(x, locs, rhos, epsilon, min_scale, max_scale, mask=mask)
    out_m = jax.block_until_ready(out_m)
    ref_m = _reference(x, locs, rhos, epsilon, min_scale, max_scale, mask=mask)
    assert jnp.allclose(out_m, ref_m, atol=1e-5, rtol=1e-5)

    # bf16 input smoke test (exercises the output-dtype cast at the store).
    x_bf16 = x.astype(jnp.bfloat16)
    out_bf16 = cloak_noise_forward(x_bf16, locs, rhos, epsilon, min_scale, max_scale)
    out_bf16 = jax.block_until_ready(out_bf16)
    assert out_bf16.dtype == jnp.bfloat16 and out_bf16.shape == x.shape
    ref_bf16 = _reference(x_bf16.astype(jnp.float32), locs, rhos, epsilon,
                          min_scale, max_scale)
    assert jnp.allclose(out_bf16.astype(jnp.float32), ref_bf16, atol=5e-2, rtol=5e-2)

    # Ragged-D path (D % 128 != 0) exercises the zero-padding fallback.
    Cr, Hr, Wr = 3, 13, 13
    xr = jax.random.normal(k_xr, (N, Cr, Hr, Wr), dtype=jnp.float32)
    locs_r = jnp.zeros((Cr, Hr, Wr), jnp.float32) + 0.01
    rhos_r = jnp.ones((Cr, Hr, Wr), jnp.float32) - 3.0
    eps_r = jax.random.normal(k_eps, (Cr, Hr, Wr), dtype=jnp.float32) * 0.1
    out_r = cloak_noise_forward(xr, locs_r, rhos_r, eps_r, min_scale, max_scale)
    out_r = jax.block_until_ready(out_r)
    ref_r = _reference(xr, locs_r, rhos_r, eps_r, min_scale, max_scale)
    assert jnp.allclose(out_r, ref_r, atol=1e-5, rtol=1e-5)

    print("KERNEL_OK")
</pallas_src>

<mosaic_0001>
module attributes {stable_mosaic.version = 11 : i64} {
  func.func @_cloak_kernel(%arg0: i32, %arg1: i32, %arg2: memref<2xf32, #tpu.memory_space<smem>>, %arg3: memref<2x512xf32, #tpu.memory_space<vmem>>, %arg4: memref<1x512xf32, #tpu.memory_space<vmem>>, %arg5: memref<1x512xf32, #tpu.memory_space<vmem>>, %arg6: memref<1x512xf32, #tpu.memory_space<vmem>>, %arg7: memref<2x512xf32, #tpu.memory_space<vmem>>, %arg8: memref<1x512xf32, #tpu.memory_space<vmem>>) attributes {dimension_semantics = [#tpu.dimension_semantics<parallel>, #tpu.dimension_semantics<arbitrary>], iteration_bounds = array<i64: 2, 1>, scalar_prefetch = 0 : i64, scratch_operands = 1 : i64, tpu.core_type = #tpu.core_type<tc>, window_params = [{transform_indices = @transform_0, window_bounds = array<i64: 2>}, {transform_indices = @transform_1, window_bounds = array<i64: 2, 512>}, {transform_indices = @transform_2, window_bounds = array<i64: 1, 512>}, {transform_indices = @transform_3, window_bounds = array<i64: 1, 512>}, {transform_indices = @transform_4, window_bounds = array<i64: 1, 512>}, {transform_indices = @transform_5, window_bounds = array<i64: 2, 512>}]} {
    %c0_i32 = arith.constant 0 : i32
    %0 = arith.cmpi eq, %arg1, %c0_i32 : i32
    %1 = arith.extui %0 : i1 to i32
    %c0_i32_0 = arith.constant 0 : i32
    %2 = arith.cmpi ne, %1, %c0_i32_0 : i32
    scf.if %2 {
      %c0_6 = arith.constant 0 : index
      %8 = memref.load %arg2[%c0_6] : memref<2xf32, #tpu.memory_space<smem>>
      %c1 = arith.constant 1 : index
      %9 = memref.load %arg2[%c1] : memref<2xf32, #tpu.memory_space<smem>>
      %c0_7 = arith.constant 0 : index
      %c0_8 = arith.constant 0 : index
      %10 = vector.load %arg5[%c0_7, %c0_8] : memref<1x512xf32, #tpu.memory_space<vmem>>, vector<1x512xf32>
      %11 = math.tanh %10 : vector<1x512xf32>
      %cst = arith.constant 1.000000e+00 : f32
      %12 = vector.broadcast %cst : f32 to vector<1x512xf32>
      %13 = arith.addf %12, %11 : vector<1x512xf32>
      %cst_9 = arith.constant 5.000000e-01 : f32
      %14 = vector.broadcast %cst_9 : f32 to vector<1x512xf32>
      %15 = arith.mulf %13, %14 : vector<1x512xf32>
      %16 = arith.subf %9, %8 : f32
      %17 = vector.broadcast %16 : f32 to vector<1x512xf32>
      %18 = arith.mulf %15, %17 : vector<1x512xf32>
      %19 = vector.broadcast %8 : f32 to vector<1x512xf32>
      %20 = arith.addf %18, %19 : vector<1x512xf32>
      %c0_10 = arith.constant 0 : index
      %c0_11 = arith.constant 0 : index
      %21 = vector.load %arg4[%c0_10, %c0_11] : memref<1x512xf32, #tpu.memory_space<vmem>>, vector<1x512xf32>
      %c0_12 = arith.constant 0 : index
      %c0_13 = arith.constant 0 : index
      %22 = vector.load %arg6[%c0_12, %c0_13] : memref<1x512xf32, #tpu.memory_space<vmem>>, vector<1x512xf32>
      %23 = arith.mulf %20, %22 : vector<1x512xf32>
      %24 = arith.addf %21, %23 : vector<1x512xf32>
      %c0_14 = arith.constant 0 : index
      %c0_15 = arith.constant 0 : index
      %25 = vector.load %arg8[%c0_14, %c0_15] : memref<1x512xf32, #tpu.memory_space<vmem>>, vector<1x512xf32>
      tpu.vector_store %arg8[%c0_14, %c0_15], %24 {strides = array<i32>} : memref<1x512xf32, #tpu.memory_space<vmem>>, vector<1x512xf32>,
    } else {
    }
    %c0 = arith.constant 0 : index
    %c0_1 = arith.constant 0 : index
    %3 = vector.load %arg3[%c0, %c0_1] : memref<2x512xf32, #tpu.memory_space<vmem>>, vector<2x512xf32>
    %c0_2 = arith.constant 0 : index
    %c0_3 = arith.constant 0 : index
    %4 = vector.load %arg8[%c0_2, %c0_3] : memref<1x512xf32, #tpu.memory_space<vmem>>, vector<1x512xf32>
    %5 = vector.broadcast %4 : vector<1x512xf32> to vector<2x512xf32>
    %6 = arith.addf %3, %5 : vector<2x512xf32>
    %c0_4 = arith.constant 0 : index
    %c0_5 = arith.constant 0 : index
    %7 = vector.load %arg7[%c0_4, %c0_5] : memref<2x512xf32, #tpu.memory_space<vmem>>, vector<2x512xf32>
    tpu.vector_store %arg7[%c0_4, %c0_5], %6 {strides = array<i32>} : memref<2x512xf32, #tpu.memory_space<vmem>>, vector<2x512xf32>,
    return
  }
  func.func @transform_0(%arg0: i32, %arg1: i32) -> i32 {
    %c0_i32 = arith.constant 0 : i32
    %c0_i32_0 = arith.constant 0 : i32
    return %c0_i32 : i32
  }
  func.func @transform_1(%arg0: i32, %arg1: i32) -> (i32, i32) {
    %c0_i32 = arith.constant 0 : i32
    return %arg1, %arg0 : i32, i32
  }
  func.func @transform_2(%arg0: i32, %arg1: i32) -> (i32, i32) {
    %c0_i32 = arith.constant 0 : i32
    %c0_i32_0 = arith.constant 0 : i32
    return %c0_i32, %arg0 : i32, i32
  }
  func.func @transform_3(%arg0: i32, %arg1: i32) -> (i32, i32) {
    %c0_i32 = arith.constant 0 : i32
    %c0_i32_0 = arith.constant 0 : i32
    return %c0_i32, %arg0 : i32, i32
  }
  func.func @transform_4(%arg0: i32, %arg1: i32) -> (i32, i32) {
    %c0_i32 = arith.constant 0 : i32
    %c0_i32_0 = arith.constant 0 : i32
    return %c0_i32, %arg0 : i32, i32
  }
  func.func @transform_5(%arg0: i32, %arg1: i32) -> (i32, i32) {
    %c0_i32 = arith.constant 0 : i32
    return %arg1, %arg0 : i32, i32
  }
}

</mosaic_0001>

<llo_original>
// kernel: tpu_custom_call.1
$region0: #{tpu_custom_call.1}
  #allocation0 [shape = 'u32[]', space=smem, size = 0x4, offset = 0x4, fixed_abs, tag = 'smem constant byte address 0x4 - core index']
  #allocation1 [shape = 'u32[72,128]{1,0:T(1,128)}', space=vmem, size = 0x9000, scoped, tag = 'internal scratch']
  #allocation2 [shape = 'f32[1,512]{1,0:T(1,128)}', space=vmem, size = 0x800, scoped, tag = 'scratch operand']
  %s0 = inlined_call_operand.hbm [shape: f32[2], index: 0, kind: input, shape index: {}]
  %s1 = inlined_call_operand.hbm [shape: f32[2,1024], index: 1, kind: input, shape index: {}]
  %s2 = inlined_call_operand.hbm [shape: f32[1,1024], index: 2, kind: input, shape index: {}]
  %s3 = inlined_call_operand.hbm [shape: f32[1,1024], index: 3, kind: input, shape index: {}]
  %s4 = inlined_call_operand.hbm [shape: f32[1,1024], index: 4, kind: input, shape index: {}]
  %s5 = inlined_call_operand.hbm [shape: f32[2,1024], index: 5, kind: output, shape index: {}]
  %s6 = sld [smem:[#allocation0]]
  $region77: #{tpu_custom_call.1} parent=0
    _
  %s8 = ssub.s32 1, %s6
  %s9 = scalar_select 0, %s8, %s6
  $region1: #{tpu_custom_call.1} parent=0
    #allocation3 [shape = 'u8[512]{0}', space=smem, size = 0x200, scoped, tag = 'input window, operand 0, single buffered']
    #allocation4 [shape = 's32[2]{0}', space=sflag, size = 0x8, scoped, tag = 'scoped memory for tpu_custom_call.1']
    #allocation5 [shape = 's32[2]{0}', space=sflag, size = 0x8, scoped, tag = 'scoped memory for tpu_custom_call.1']
    #allocation6 [shape = 's32[2]{0}', space=sflag, size = 0x8, scoped, tag = 'scoped memory for tpu_custom_call.1']
    #allocation7 [shape = 'u8[8192]{0}', space=vmem, size = 0x2000, scoped, tag = 'input window, operand 1']
    #allocation8 [shape = 'u8[4096]{0}', space=vmem, size = 0x1000, scoped, tag = 'input window, operand 2']
    #allocation9 [shape = 's32[2]{0}', space=sflag, size = 0x8, scoped, tag = 'scoped memory for tpu_custom_call.1']
    #allocation10 [shape = 'u8[4096]{0}', space=vmem, size = 0x1000, scoped, tag = 'input window, operand 3']
    #allocation11 [shape = 'u8[4096]{0}', space=vmem, size = 0x1000, scoped, tag = 'input window, operand 4']
    #allocation12 [shape = 's32[2]{0}', space=sflag, size = 0x8, scoped, tag = 'scoped memory for tpu_custom_call.1']
    #allocation13 [shape = 'u8[8192]{0}', space=vmem, size = 0x2000, scoped, tag = 'output window, operand 0']
    %10 = vsyncpa [#allocation6], 0
    %11 = vsyncpa [#allocation4], 0
    %s12 = scalar_lea.sflag [#allocation4], 1
    %13 = vsyncpa %s12, 0
    %14 = vsyncpa [#allocation9], 0
    %s15 = scalar_lea.sflag [#allocation9], 1
    %16 = vsyncpa %s15, 0
    %17 = vsyncpa [#allocation12], 0
    %s18 = scalar_lea.sflag [#allocation12], 1
    %19 = vsyncpa %s18, 0
    %20 = vsyncpa [#allocation5], 0
    %s21 = scalar_lea.sflag [#allocation5], 1
    %22 = vsyncpa %s21, 0
    loop: start=0, step=1, limit=4
    $region2: #{tpu_custom_call.1} parent=1 // loop_pre_header
      _
    $region3: #{tpu_custom_call.1} parent=1 // loop_header
      %s24 = sphi 0, %s28
      %p25 = scmp.ge.s32.totalorder %s24, 4
      %s31 = sphi 0, %s43
      %s32 = sphi 0, %s39
      %s33 = sphi 0, %s31
      %s34 = sphi 0, %s32
      %s35 = sphi 0, %s33
      %s36 = sphi 0, %s34
      %s44 = sphi 0, %s44
      %s46 = sphi 0, %s44
      %s47 = sphi 0, %s46
      %s61 = sphi 0, %s47
      %s69 = sphi 0, %s71
      %s72 = sphi 0, %s69
      %s73 = sphi 0, %s72
      %s89 = sphi 0, %s73
      %s95 = sphi 0, %s97
      %s98 = sphi 0, %s95
      %s99 = sphi 0, %s98
      %s115 = sphi 0, %s99
      %s121 = sphi 0, %s123
      %s124 = sphi 0, %s121
      %s125 = sphi 0, %s124
      %s141 = sphi 0, %s125
      %s147 = sphi 0, %s149
      %s150 = sphi 0, %s147
      %s151 = sphi 0, %s150
      %s167 = sphi 0, %s151
      %s175 = sphi 0, %s177
      %s178 = sphi 0, %s175
      %s179 = sphi 0, %s178
      %s195 = sphi 0, %s179
    $region4: #{tpu_custom_call.1} parent=1 // loop_header_branch
      %27 = sbr.rel (%p25) target = $region8
    $region5: #{tpu_custom_call.1} parent=1 // loop_body
      %s29 = ssub.s32 %s24, 1
      %s30 = ssub.s32 %s24, 2
      %s37 = sadd.s32 1, %s32
      %p38 = scmp.ge.s32.totalorder %s37, 1
      %s39 = scalar_select %p38, 0, %s37
      %s40 = sadd.s32 1, %s31
      %s41 = scalar_select %p38, %s40, %s31
      %p42 = scmp.ge.s32.totalorder %s41, 2
      %s43 = scalar_select %p42, 0, %s41
      %s45 = sadd.s32 %s44, 1
      %p48 = scmp.eq.s32.totalorder %s24, 1
      %p49 = scmp.ne.s32.totalorder %s44, %s46
      %p50 = scmp.eq.s32.totalorder %s24, 0
      %p51 = por %p49, %p50
      %p52 = scmp.ne.s32.totalorder %s44, %s46
      %p53 = scmp.eq.s32.totalorder %s29, 1
      %p54 = por %p52, %p53
      %p55 = scmp.ne.s32.totalorder %s46, %s47
      %p56 = scmp.eq.s32.totalorder %s29, 0
      %p57 = por %p55, %p56
      %p58 = scmp.ne.s32.totalorder %s46, %s47
      %p59 = scmp.eq.s32.totalorder %s30, 1
      %p60 = por %p58, %p59
      %p62 = scmp.ne.s32.totalorder %s47, %s61
      %p63 = scmp.eq.s32.totalorder %s30, 0
      %p64 = por %p62, %p63
      %s65 = ssub.s32 %s32, %s39
      %s66 = ssub.s32 %s31, %s43
      %s67 = sor.u32 %s65, %s66
      %p68 = scmp.eq.s32.totalorder %s67, 0
      %s70 = sadd.s32 %s69, 1
      %s71 = scalar_select %p68, %s69, %s70
      %p74 = pneg %p68
      %p75 = scmp.eq.s32.totalorder %s24, 1
      %p76 = por %p74, %p75
      %p77 = scmp.ne.s32.totalorder %s69, %s72
      %p78 = scmp.eq.s32.totalorder %s24, 0
      %p79 = por %p77, %p78
      %p80 = scmp.ne.s32.totalorder %s69, %s72
      %p81 = scmp.eq.s32.totalorder %s29, 1
      %p82 = por %p80, %p81
      %p83 = scmp.ne.s32.totalorder %s72, %s73
      %p84 = scmp.eq.s32.totalorder %s29, 0
      %p85 = por %p83, %p84
      %p86 = scmp.ne.s32.totalorder %s72, %s73
      %p87 = scmp.eq.s32.totalorder %s30, 1
      %p88 = por %p86, %p87
      %p90 = scmp.ne.s32.totalorder %s73, %s89
      %p91 = scmp.eq.s32.totalorder %s30, 0
      %p92 = por %p90, %p91
      %s93 = ssub.s32 %s31, %s43
      %p94 = scmp.eq.s32.totalorder %s93, 0
      %s96 = sadd.s32 %s95, 1
      %s97 = scalar_select %p94, %s95, %s96
      %p100 = pneg %p94
      %p101 = scmp.eq.s32.totalorder %s24, 1
      %p102 = por %p100, %p101
      %p103 = scmp.ne.s32.totalorder %s95, %s98
      %p104 = scmp.eq.s32.totalorder %s24, 0
      %p105 = por %p103, %p104
      %p106 = scmp.ne.s32.totalorder %s95, %s98
      %p107 = scmp.eq.s32.totalorder %s29, 1
      %p108 = por %p106, %p107
      %p109 = scmp.ne.s32.totalorder %s98, %s99
      %p110 = scmp.eq.s32.totalorder %s29, 0
      %p111 = por %p109, %p110
      %p112 = scmp.ne.s32.totalorder %s98, %s99
      %p113 = scmp.eq.s32.totalorder %s30, 1
      %p114 = por %p112, %p113
      %p116 = scmp.ne.s32.totalorder %s99, %s115
      %p117 = scmp.eq.s32.totalorder %s30, 0
      %p118 = por %p116, %p117
      %s119 = ssub.s32 %s31, %s43
      %p120 = scmp.eq.s32.totalorder %s119, 0
      %s122 = sadd.s32 %s121, 1
      %s123 = scalar_select %p120, %s121, %s122
      %p126 = pneg %p120
      %p127 = scmp.eq.s32.totalorder %s24, 1
      %p128 = por %p126, %p127
      %p129 = scmp.ne.s32.totalorder %s121, %s124
      %p130 = scmp.eq.s32.totalorder %s24, 0
      %p131 = por %p129, %p130
      %p132 = scmp.ne.s32.totalorder %s121, %s124
      %p133 = scmp.eq.s32.totalorder %s29, 1
      %p134 = por %p132, %p133
      %p135 = scmp.ne.s32.totalorder %s124, %s125
      %p136 = scmp.eq.s32.totalorder %s29, 0
      %p137 = por %p135, %p136
      %p138 = scmp.ne.s32.totalorder %s124, %s125
      %p139 = scmp.eq.s32.totalorder %s30, 1
      %p140 = por %p138, %p139
      %p142 = scmp.ne.s32.totalorder %s125, %s141
      %p143 = scmp.eq.s32.totalorder %s30, 0
      %p144 = por %p142, %p143
      %s145 = ssub.s32 %s31, %s43
      %p146 = scmp.eq.s32.totalorder %s145, 0
      %s148 = sadd.s32 %s147, 1
      %s149 = scalar_select %p146, %s147, %s148
      %p152 = pneg %p146
      %p153 = scmp.eq.s32.totalorder %s24, 1
      %p154 = por %p152, %p153
      %p155 = scmp.ne.s32.totalorder %s147, %s150
      %p156 = scmp.eq.s32.totalorder %s24, 0
      %p157 = por %p155, %p156
      %p158 = scmp.ne.s32.totalorder %s147, %s150
      %p159 = scmp.eq.s32.totalorder %s29, 1
      %p160 = por %p158, %p159
      %p161 = scmp.ne.s32.totalorder %s150, %s151
      %p162 = scmp.eq.s32.totalorder %s29, 0
      %p163 = por %p161, %p162
      %p164 = scmp.ne.s32.totalorder %s150, %s151
      %p165 = scmp.eq.s32.totalorder %s30, 1
      %p166 = por %p164, %p165
      %p168 = scmp.ne.s32.totalorder %s151, %s167
      %p169 = scmp.eq.s32.totalorder %s30, 0
      %p170 = por %p168, %p169
      %s171 = ssub.s32 %s32, %s39
      %s172 = ssub.s32 %s31, %s43
      %s173 = sor.u32 %s171, %s172
      %p174 = scmp.eq.s32.totalorder %s173, 0
      %s176 = sadd.s32 %s175, 1
      %s177 = scalar_select %p174, %s175, %s176
      %p180 = pneg %p174
      %p181 = scmp.eq.s32.totalorder %s24, 1
      %p182 = por %p180, %p181
      %p183 = scmp.ne.s32.totalorder %s175, %s178
      %p184 = scmp.eq.s32.totalorder %s24, 0
      %p185 = por %p183, %p184
      %p186 = scmp.ne.s32.totalorder %s175, %s178
      %p187 = scmp.eq.s32.totalorder %s29, 1
      %p188 = por %p186, %p187
      %p189 = scmp.ne.s32.totalorder %s178, %s179
      %p190 = scmp.eq.s32.totalorder %s29, 0
      %p191 = por %p189, %p190
      %p192 = scmp.ne.s32.totalorder %s178, %s179
      %p193 = scmp.eq.s32.totalorder %s30, 1
      %p194 = por %p192, %p193
      %p196 = scmp.ne.s32.totalorder %s179, %s195
      %p197 = scmp.eq.s32.totalorder %s30, 0
      %p198 = por %p196, %p197
      %p199 = scmp.le.s32.totalorder 1, %s24
      %p200 = scmp.lt.s32.totalorder %s24, 3
      %p201 = pnand %p199, %p200
      %p202 = pneg %p201
      // Predicated region
      $region9: #{tpu_custom_call.1} parent=5 // pred_check
        _
      $region10: #{tpu_custom_call.1} parent=5 // pred_check_branch
        %204 = sbr.rel (%p201) target = $region12
      $region11: #{tpu_custom_call.1} parent=5 // pred_region
        %s205 = ssub.s32 %s24, 1
        // Predicated region
        $region13: #{tpu_custom_call.1} parent=11 // pred_check
          %p206 = pneg %p57
        $region14: #{tpu_custom_call.1} parent=11 // pred_check_branch
          %208 = sbr.rel (%p206) target = $region16
        $region15: #{tpu_custom_call.1} parent=11 // pred_region
          %210 = vsyncadd [#allocation6], 0
          %s212 = sshll.u32 %s0, 4
          %s213 = int_to_ptr.hbm [resolvable:$true] %s212
          %215 = dma.hbm_to_smem %s213, 16, [#allocation3], [#allocation6]
        $region16: #{tpu_custom_call.1} parent=11 // pred_fallthru
          _
      $region12: #{tpu_custom_call.1} parent=5 // pred_fallthru
        _
      %p216 = scmp.lt.s32.totalorder %s24, 2
      // Predicated region
      $region17: #{tpu_custom_call.1} parent=5 // pred_check
        %p217 = pneg %p216
      $region18: #{tpu_custom_call.1} parent=5 // pred_check_branch
        %219 = sbr.rel (%p217) target = $region20
      $region19: #{tpu_custom_call.1} parent=5 // pred_region
        // Predicated region
        $region21: #{tpu_custom_call.1} parent=19 // pred_check
          %p220 = pneg %p79
        $region22: #{tpu_custom_call.1} parent=19 // pred_check_branch
          %222 = sbr.rel (%p220) target = $region24
        $region23: #{tpu_custom_call.1} parent=19 // pred_region
          %s223 = sand.u32 %s69, 1
          %s224 = scalar_lea.sflag [#allocation4], %s223
          %s225 = sand.u32 %s69, 1
          %s226 = smul.addr %s225, 8
          %s227 = scalar_lea.vmem [#allocation7], %s226
          %s228 = smul.u32 4, %s31
          %230 = vsyncadd %s224, 0
          %s231 = smul.addr %s32, 8
          %s232 = sadd.s32 %s228, %s231
          %s233 = smul.addr %s232, 2
          %s234 = scalar_lea.hbm %s1, %s233
          %s236 = sshll.u32 %s234, 4
          %s237 = int_to_ptr.hbm [resolvable:$true] %s236
          %s238 = sshll.u32 %s227, 4
          %s239 = int_to_ptr.vmem [resolvable:$true] %s238
          %241 = dma.hbm_to_vmem [thread:$0]  %s237, 128, %s239, %s224
        $region24: #{tpu_custom_call.1} parent=19 // pred_fallthru
          _
        // Predicated region
        $region25: #{tpu_custom_call.1} parent=19 // pred_check
          %p242 = pneg %p105
        $region26: #{tpu_custom_call.1} parent=19 // pred_check_branch
          %244 = sbr.rel (%p242) target = $region28
        $region27: #{tpu_custom_call.1} parent=19 // pred_region
          %s245 = sand.u32 %s24, 1
          %s246 = scalar_lea.sflag [#allocation9], %s245
          %s247 = sand.u32 %s95, 1
          %s248 = smul.addr %s247, 4
          %s249 = scalar_lea.vmem [#allocation8], %s248
          %s250 = smul.u32 4, %s31
          %252 = vsyncadd %s246, 0
          %s253 = scalar_lea.hbm %s2, %s250
          %s255 = sshll.u32 %s253, 4
          %s256 = int_to_ptr.hbm [resolvable:$true] %s255
          %s257 = sshll.u32 %s249, 4
          %s258 = int_to_ptr.vmem [resolvable:$true] %s257
          %260 = dma.hbm_to_vmem [thread:$0]  %s256, 64, %s258, %s246
        $region28: #{tpu_custom_call.1} parent=19 // pred_fallthru
          _
        // Predicated region
        $region29: #{tpu_custom_call.1} parent=19 // pred_check
          %p261 = pneg %p131
        $region30: #{tpu_custom_call.1} parent=19 // pred_check_branch
          %263 = sbr.rel (%p261) target = $region32
        $region31: #{tpu_custom_call.1} parent=19 // pred_region
          %s264 = sand.u32 %s24, 1
          %s265 = scalar_lea.sflag [#allocation9], %s264
          %s266 = sand.u32 %s121, 1
          %s267 = smul.addr %s266, 4
          %s268 = scalar_lea.vmem [#allocation10], %s267
          %s269 = smul.u32 4, %s31
          %271 = vsyncadd %s265, 0
          %s272 = scalar_lea.hbm %s3, %s269
          %s274 = sshll.u32 %s272, 4
          %s275 = int_to_ptr.hbm [resolvable:$true] %s274
          %s276 = sshll.u32 %s268, 4
          %s277 = int_to_ptr.vmem [resolvable:$true] %s276
          %279 = dma.hbm_to_vmem [thread:$0]  %s275, 64, %s277, %s265
        $region32: #{tpu_custom_call.1} parent=19 // pred_fallthru
          _
        // Predicated region
        $region33: #{tpu_custom_call.1} parent=19 // pred_check
          %p280 = pneg %p157
        $region34: #{tpu_custom_call.1} parent=19 // pred_check_branch
          %282 = sbr.rel (%p280) target = $region36
        $region35: #{tpu_custom_call.1} parent=19 // pred_region
          %s283 = sand.u32 %s147, 1
          %s284 = scalar_lea.sflag [#allocation12], %s283
          %s285 = sand.u32 %s147, 1
          %s286 = smul.addr %s285, 4
          %s287 = scalar_lea.vmem [#allocation11], %s286
          %s288 = smul.u32 4, %s31
          %290 = vsyncadd %s284, 0
          %s291 = scalar_lea.hbm %s4, %s288
          %s293 = sshll.u32 %s291, 4
          %s294 = int_to_ptr.hbm [resolvable:$true] %s293
          %s295 = sshll.u32 %s287, 4
          %s296 = int_to_ptr.vmem [resolvable:$true] %s295
          %298 = dma.hbm_to_vmem [thread:$0]  %s294, 64, %s296, %s284
        $region36: #{tpu_custom_call.1} parent=19 // pred_fallthru
          _
      $region20: #{tpu_custom_call.1} parent=5 // pred_fallthru
        _
      %p299 = scmp.le.s32.totalorder 1, %s24
      %p300 = scmp.lt.s32.totalorder %s24, 3
      %p301 = pnand %p299, %p300
      %p302 = pneg %p301
      // Predicated region
      $region37: #{tpu_custom_call.1} parent=5 // pred_check
        _
      $region38: #{tpu_custom_call.1} parent=5 // pred_check_branch
        %304 = sbr.rel (%p301) target = $region40
      $region39: #{tpu_custom_call.1} parent=5 // pred_region
        %s305 = ssub.s32 %s24, 1
        // Predicated region
        $region41: #{tpu_custom_call.1} parent=39 // pred_check
          %p306 = pneg %p57
        $region42: #{tpu_custom_call.1} parent=39 // pred_check_branch
          %308 = sbr.rel (%p306) target = $region44
        $region43: #{tpu_custom_call.1} parent=39 // pred_region
          %310 = dma.done [#allocation6], 16
        $region44: #{tpu_custom_call.1} parent=39 // pred_fallthru
          _
        %s311 = sand.u32 %s72, 1
        %s312 = scalar_lea.sflag [#allocation4], %s311
        %s313 = sand.u32 %s72, 1
        %s314 = smul.addr %s313, 8
        %s315 = scalar_lea.vmem [#allocation7], %s314
        // Predicated region
        $region45: #{tpu_custom_call.1} parent=39 // pred_check
          %p316 = pneg %p85
        $region46: #{tpu_custom_call.1} parent=39 // pred_check_branch
          %318 = sbr.rel (%p316) target = $region48
        $region47: #{tpu_custom_call.1} parent=39 // pred_region
          %320 = dma.done %s312, 128
        $region48: #{tpu_custom_call.1} parent=39 // pred_fallthru
          _
        %s321 = sand.u32 %s29, 1
        %s322 = scalar_lea.sflag [#allocation9], %s321
        %s323 = sand.u32 %s98, 1
        %s324 = smul.addr %s323, 4
        %s325 = scalar_lea.vmem [#allocation8], %s324
        // Predicated region
        $region49: #{tpu_custom_call.1} parent=39 // pred_check
          %p326 = pneg %p111
        $region50: #{tpu_custom_call.1} parent=39 // pred_check_branch
          %328 = sbr.rel (%p326) target = $region52
        $region51: #{tpu_custom_call.1} parent=39 // pred_region
          %330 = dma.done %s322, 64
        $region52: #{tpu_custom_call.1} parent=39 // pred_fallthru
          _
        %s331 = sand.u32 %s29, 1
        %s332 = scalar_lea.sflag [#allocation9], %s331
        %s333 = sand.u32 %s124, 1
        %s334 = smul.addr %s333, 4
        %s335 = scalar_lea.vmem [#allocation10], %s334
        // Predicated region
        $region53: #{tpu_custom_call.1} parent=39 // pred_check
          %p336 = pneg %p137
        $region54: #{tpu_custom_call.1} parent=39 // pred_check_branch
          %338 = sbr.rel (%p336) target = $region56
        $region55: #{tpu_custom_call.1} parent=39 // pred_region
          %340 = dma.done %s332, 64
        $region56: #{tpu_custom_call.1} parent=39 // pred_fallthru
          _
        %s341 = sand.u32 %s150, 1
        %s342 = scalar_lea.sflag [#allocation12], %s341
        %s343 = sand.u32 %s150, 1
        %s344 = smul.addr %s343, 4
        %s345 = scalar_lea.vmem [#allocation11], %s344
        // Predicated region
        $region57: #{tpu_custom_call.1} parent=39 // pred_check
          %p346 = pneg %p163
        $region58: #{tpu_custom_call.1} parent=39 // pred_check_branch
          %348 = sbr.rel (%p346) target = $region60
        $region59: #{tpu_custom_call.1} parent=39 // pred_region
          %350 = dma.done %s342, 64
        $region60: #{tpu_custom_call.1} parent=39 // pred_fallthru
          _
        %351 = sfence
        %p352 = pneg %p57
        %p353 = pneg %p54
        %s354 = sand.u32 %s72, 1
        %s355 = scalar_lea.sflag [#allocation4], %s354
        %s356 = sand.u32 %s72, 1
        %s357 = smul.addr %s356, 8
        %s358 = scalar_lea.vmem [#allocation7], %s357
        %p359 = pneg %p85
        %p360 = pneg %p82
        %s361 = sand.u32 %s29, 1
        %s362 = scalar_lea.sflag [#allocation9], %s361
        %s363 = sand.u32 %s98, 1
        %s364 = smul.addr %s363, 4
        %s365 = scalar_lea.vmem [#allocation8], %s364
        %p366 = pneg %p111
        %p367 = pneg %p108
        %s368 = sand.u32 %s29, 1
        %s369 = scalar_lea.sflag [#allocation9], %s368
        %s370 = sand.u32 %s124, 1
        %s371 = smul.addr %s370, 4
        %s372 = scalar_lea.vmem [#allocation10], %s371
        %p373 = pneg %p137
        %p374 = pneg %p134
        %s375 = sand.u32 %s150, 1
        %s376 = scalar_lea.sflag [#allocation12], %s375
        %s377 = sand.u32 %s150, 1
        %s378 = smul.addr %s377, 4
        %s379 = scalar_lea.vmem [#allocation11], %s378
        %p380 = pneg %p163
        %p381 = pneg %p160
        %p382 = pneg %p191
        %p383 = pneg %p188
        %s384 = sand.u32 %s178, 1
        %s385 = scalar_lea.sflag [#allocation5], %s384
        %s386 = sand.u32 %s178, 1
        %s387 = smul.addr %s386, 8
        %s388 = scalar_lea.vmem [#allocation13], %s387
        %s389 = smul.u32 4, %s33
        %s390 = smul.u32 4, %s33
        %s391 = smul.u32 4, %s33
        %s392 = smul.u32 4, %s33
        %s393 = smul.u32 4, %s33
        %p394 = scmp.eq.s32.totalorder %s34, 0
        // Predicated region
        $region61: #{tpu_custom_call.1} parent=39 // pred_check
          %p395 = pneg %p394
        $region62: #{tpu_custom_call.1} parent=39 // pred_check_branch
          %397 = sbr.rel (%p395) target = $region64
        $region63: #{tpu_custom_call.1} parent=39 // pred_region
          %s398 = sld [smem:[#allocation3]]
          %s399 = sld [smem:[#allocation3 + $0x1]]
          %v400 = vld [vmem:[%s335] sm:$0xf]
          %v401 = vtanh.pop %v400
          %v402 = vadd.f32 %v401, 1.0
          %v403 = vmul.f32 %v402, 0.5
          %s404 = ssub.f32 %s399, %s398
          %v405 = vstv %s404
          %v406 = vmul.f32 %v403, %v405
          %v407 = vstv %s398
          %v408 = vadd.f32 %v406, %v407
          %v409 = vld [vmem:[%s325] sm:$0xf]
          %v410 = vld [vmem:[%s345] sm:$0xf]
          %v411 = vmul.f32 %v408, %v410
          %v412 = vadd.f32 %v409, %v411
          %v413 = vlaneseq
          %vm414 = vcmp.ge.s32.totalorder %v413, 0
          %vm415 = vcmp.lt.s32.totalorder %v413, 512
          %vm416 = vmand %vm414, %vm415
          %417 = vst.msk [vmem:[#allocation2] sm:$0xf] %vm416, %v412
        $region64: #{tpu_custom_call.1} parent=39 // pred_fallthru
          _
        %v418 = vld [vmem:[%s315] sm:$0xff]
        %v419 = vld [vmem:[#allocation2] sm:$0xf]
        %v421 = vperm.slane %v419, 0
        %v422 = vperm.slane %v419, 1
        %v423 = vperm.slane %v419, 2
        %v424 = vperm.slane %v419, 3
        %v425 = vrot.slane %v422, 6
        %v426 = vrot.slane %v423, 4
        %v427 = vrot.slane %v424, 2
        %vm428 = vcmask 1041408
        %v429 = vsel %vm428, %v421, %v425
        %vm430 = vcmask 1045508
        %v431 = vsel %vm430, %v426, %v427
        %vm432 = vcmask 1043456
        %v433 = vsel %vm432, %v429, %v431
        %v435 = vadd.f32 %v418, %v433
        %436 = vst [vmem:[%s388] sm:$0xff] %v435
        %s437 = sand.u32 %s178, 1
        %s438 = scalar_lea.sflag [#allocation5], %s437
        %s439 = sand.u32 %s178, 1
        %s440 = smul.addr %s439, 8
        %s441 = scalar_lea.vmem [#allocation13], %s440
        // Predicated region
        $region65: #{tpu_custom_call.1} parent=39 // pred_check
          %p442 = pneg %p188
        $region66: #{tpu_custom_call.1} parent=39 // pred_check_branch
          %444 = sbr.rel (%p442) target = $region68
        $region67: #{tpu_custom_call.1} parent=39 // pred_region
          %s445 = smul.u32 4, %s33
          %447 = vsyncadd %s438, 0
          %s448 = smul.addr %s34, 8
          %s449 = sadd.s32 %s445, %s448
          %s450 = smul.addr %s449, 2
          %s451 = scalar_lea.hbm %s5, %s450
          %s453 = sshll.u32 %s441, 4
          %s454 = int_to_ptr.vmem [resolvable:$true] %s453
          %s455 = sshll.u32 %s451, 4
          %s456 = int_to_ptr.hbm [resolvable:$true] %s455
          %458 = dma.vmem_to_hbm [thread:$0]  %s454, 128, %s456, %s438
        $region68: #{tpu_custom_call.1} parent=39 // pred_fallthru
          _
      $region40: #{tpu_custom_call.1} parent=5 // pred_fallthru
        _
      %p459 = scmp.le.s32.totalorder 2, %s24
      // Predicated region
      $region69: #{tpu_custom_call.1} parent=5 // pred_check
        %p460 = pneg %p459
      $region70: #{tpu_custom_call.1} parent=5 // pred_check_branch
        %462 = sbr.rel (%p460) target = $region72
      $region71: #{tpu_custom_call.1} parent=5 // pred_region
        %s463 = ssub.s32 %s24, 2
        // Predicated region
        $region73: #{tpu_custom_call.1} parent=71 // pred_check
          %p464 = pneg %p194
        $region74: #{tpu_custom_call.1} parent=71 // pred_check_branch
          %466 = sbr.rel (%p464) target = $region76
        $region75: #{tpu_custom_call.1} parent=71 // pred_region
          %s467 = sand.u32 %s179, 1
          %s468 = scalar_lea.sflag [#allocation5], %s467
          %s469 = sand.u32 %s179, 1
          %s470 = smul.addr %s469, 8
          %s471 = scalar_lea.vmem [#allocation13], %s470
          %473 = dma.done %s468, 128
        $region76: #{tpu_custom_call.1} parent=71 // pred_fallthru
          _
      $region72: #{tpu_custom_call.1} parent=5 // pred_fallthru
        _
    $region6: #{tpu_custom_call.1} parent=1 // loop_footer
      %s28 = sadd.s32 1, %s24
    $region7: #{tpu_custom_call.1} parent=1 // loop_footer_branch
      %23 = sbr.rel target = $region3
    $region8: #{tpu_custom_call.1} parent=1 // loop_exit
      _
    %474 = vsyncpa [#allocation4], 1
    %s475 = scalar_lea.sflag [#allocation4], 1
    %476 = vsyncpa %s475, 1
    %477 = vsyncpa [#allocation9], 1
    %s478 = scalar_lea.sflag [#allocation9], 1
    %479 = vsyncpa %s478, 1
    %480 = vsyncpa [#allocation12], 1
    %s481 = scalar_lea.sflag [#allocation12], 1
    %482 = vsyncpa %s481, 1
    %483 = vsyncpa [#allocation5], 1
    %s484 = scalar_lea.sflag [#allocation5], 1
    %485 = vsyncpa %s484, 1
    %486 = vsyncpa [#allocation6], 1
    %s487 = scalar_lea.sflag [#allocation6], 1
    %488 = vsyncpa %s487, 1

</llo_original>
